<compile_context>
chip_gen: v7x
topology: tpu7x:2x2x1
jax: 0.10.0
libtpu: 0.0.40
codegen_flags: <defaults>
</compile_context>

<pallas_src>
import functools

import jax
import jax.numpy as jnp
from jax.experimental import pallas as pl
from jax.experimental.pallas import tpu as pltpu


# --------------------------------------------------------------------------
# Kernel
# --------------------------------------------------------------------------
def _mlp_kernel(n_layers: int, apply_out_act: bool, x_ref, *rest):
    """Fused MLP on one batch tile: (Linear -> Sigmoid)*(n-1) -> Linear [-> a_func].

    rest = (w0_ref, b0_ref, w1_ref, b1_ref, ..., out_ref)
    Weights/biases are full (padded) arrays resident in VMEM for every tile;
    x/out tiles are pipelined over the batch grid.
    """
    out_ref = rest[-1]
    param_refs = rest[:-1]

    h = x_ref[...].astype(jnp.float32)
    for i in range(n_layers):
        w = param_refs[2 * i][...]          # bf16 (in_pad, out_pad)
        b = param_refs[2 * i + 1][...]      # f32  (1, out_pad)
        # bf16 x bf16 -> f32 accumulate on the MXU.
        h = jnp.dot(h.astype(w.dtype), w,
                    preferred_element_type=jnp.float32) + b
        if i < n_layers - 1:
            # act_func = nn.Sigmoid between hidden layers (module default).
            # Kept in f32; sigmoid lowers to the EUP (exp + reciprocal).
            h = jax.nn.sigmoid(h)
    if apply_out_act:
        # Corresponds to `a_func` applied after the final Linear.
        h = jax.nn.sigmoid(h)
    out_ref[...] = h.astype(out_ref.dtype)


# --------------------------------------------------------------------------
# Params
# --------------------------------------------------------------------------
def init_dqn_params(key, s_size: int, a_size: int, linear_dims: list[int],
                    dtype=jnp.float32):
    """PyTorch-style init U(-1/sqrt(fan_in), 1/sqrt(fan_in)).

    Returns a list of (W, b) with W already transposed to (in, out) and b
    shaped (1, out). Unpadded, f32 — padding/bf16 happens in dqn_forward.
    """
    dims = [s_size] + list(linear_dims) + [a_size]
    params = []
    for i in range(len(dims) - 1):
        fan_in, fan_out = dims[i], dims[i + 1]
        key, kw, kb = jax.random.split(key, 3)
        bound = 1.0 / (fan_in ** 0.5)
        w = jax.random.uniform(kw, (fan_in, fan_out), dtype, -bound, bound)
        b = jax.random.uniform(kb, (1, fan_out), dtype, -bound, bound)
        params.append((w, b))
    return params


def _round_up(x: int, m: int) -> int:
    return ((x + m - 1) // m) * m


# --------------------------------------------------------------------------
# Host-side wrapper
# --------------------------------------------------------------------------
def dqn_forward(x, params, a_func: bool = False, tile_b: int = 512):
    """Run the DQN forward pass as a single batch-tiled pallas_call."""
    batch, s_size = x.shape
    n_layers = len(params)
    a_size = params[-1][0].shape[1]

    # ---- padded (lane-dense) dims ------------------------------------------
    dims = [s_size] + [w.shape[1] for (w, _) in params]      # real dims
    dims_p = [_round_up(d, 128) for d in dims]                # 128-padded dims
    s_pad, a_pad = dims_p[0], dims_p[-1]

    # ---- batch tiling -------------------------------------------------------
    # Small batches: one tile rounded to the 8-sublane boundary.
    # Large batches: 512-row tiles (measured sweet spot), grid over batch.
    eff_tile = min(tile_b, _round_up(batch, 8))
    padded_batch = _round_up(batch, eff_tile)
    n_tiles = padded_batch // eff_tile

    # ---- pad x --------------------------------------------------------------
    x_p = jnp.zeros((padded_batch, s_pad), jnp.float32)
    x_p = x_p.at[:batch, :s_size].set(x.astype(jnp.float32))

    # ---- pad + bf16-cast weights, pad biases (zeros in padded region) -------
    # Zero rows in layer i+1 cancel the sigmoid(0)=0.5 of padded hidden units.
    flat_params = []
    for i, (w, b) in enumerate(params):
        w_p = jnp.zeros((dims_p[i], dims_p[i + 1]), jnp.bfloat16)
        w_p = w_p.at[:dims[i], :dims[i + 1]].set(w.astype(jnp.bfloat16))
        b_p = jnp.zeros((1, dims_p[i + 1]), jnp.float32)
        b_p = b_p.at[:, :dims[i + 1]].set(b.astype(jnp.float32))
        flat_params.extend([w_p, b_p])

    # ---- block specs --------------------------------------------------------
    in_specs = [pl.BlockSpec((eff_tile, s_pad), lambda i: (i, 0))]
    for p in flat_params:
        # Full-array, constant index_map: weights/biases stay VMEM-resident
        # across all batch tiles (no re-DMA per grid step).
        in_specs.append(pl.BlockSpec(p.shape, lambda i: (0, 0)))
    out_specs = pl.BlockSpec((eff_tile, a_pad), lambda i: (i, 0))

    # ---- cost estimate ------------------------------------------------------
    flops = 2 * padded_batch * sum(dims_p[j] * dims_p[j + 1]
                                   for j in range(n_layers))
    transcendentals = padded_batch * (sum(dims_p[1:-1])
                                      + (a_pad if a_func else 0))
    bytes_accessed = (x_p.size * x_p.dtype.itemsize
                      + sum(p.size * p.dtype.itemsize for p in flat_params)
                      + padded_batch * a_pad * 4)
    cost = pl.CostEstimate(flops=flops, transcendentals=transcendentals,
                           bytes_accessed=bytes_accessed)

    kernel = functools.partial(_mlp_kernel, n_layers, a_func)

    out_p = pl.pallas_call(
        kernel,
        out_shape=jax.ShapeDtypeStruct((padded_batch, a_pad), jnp.float32),
        grid=(n_tiles,),
        in_specs=in_specs,
        out_specs=out_specs,
        compiler_params=pltpu.CompilerParams(
            dimension_semantics=("parallel",),      # shard batch across TCs
            vmem_limit_bytes=32 * 1024 * 1024,      # fits v7x's 64 MiB VMEM
        ),
        cost_estimate=cost,
    )(x_p, *flat_params)

    # Strip batch/feature padding; padded output columns are exactly zero.
    return out_p[:batch, :a_size].astype(x.dtype)


# --------------------------------------------------------------------------
# References
# --------------------------------------------------------------------------
def dqn_forward_ref_f32(x, params, a_func: bool = False):
    """Pure-f32 reference (PyTorch-forward semantics)."""
    h = x.astype(jnp.float32)
    n_layers = len(params)
    for i, (w, b) in enumerate(params):
        h = h @ w.astype(jnp.float32) + b.astype(jnp.float32)
        if i < n_layers - 1:
            h = jax.nn.sigmoid(h)
    if a_func:
        h = jax.nn.sigmoid(h)
    return h.astype(x.dtype)


def dqn_forward_ref_bf16(x, params, a_func: bool = False):
    """Reference matching the kernel's bf16-MXU / f32-accumulate math."""
    h = x.astype(jnp.float32)
    n_layers = len(params)
    for i, (w, b) in enumerate(params):
        h = jnp.dot(h.astype(jnp.bfloat16), w.astype(jnp.bfloat16),
                    preferred_element_type=jnp.float32) + b.astype(jnp.float32)
        if i < n_layers - 1:
            h = jax.nn.sigmoid(h)
    if a_func:
        h = jax.nn.sigmoid(h)
    return h.astype(x.dtype)


# --------------------------------------------------------------------------
# Demo / self-test
# --------------------------------------------------------------------------
if __name__ == "__main__":
    # DQN(s_size=16, a_size=8, linear_dims=[32, 32], act_func=nn.Sigmoid,
    #     a_func=None)
    s_size, a_size = 16, 8
    linear_dims = [32, 32]

    key = jax.random.PRNGKey(0)
    key, kx_small, kx_big = jax.random.split(key, 3)
    params = init_dqn_params(key, s_size, a_size, linear_dims)

    # Case 1: small batch (single grid step), as in per-env-step inference.
    x_small = jax.random.normal(kx_small, (8, s_size), jnp.float32)
    out_small = jax.block_until_ready(dqn_forward(x_small, params, a_func=False))
    assert out_small.shape == (8, a_size), out_small.shape
    ref_bf16 = dqn_forward_ref_bf16(x_small, params, a_func=False)
    ref_f32 = dqn_forward_ref_f32(x_small, params, a_func=False)
    assert jnp.allclose(out_small, ref_bf16, atol=1e-4, rtol=1e-4), \
        "mismatch vs bf16 reference (small batch)"
    assert jnp.allclose(out_small, ref_f32, atol=5e-2, rtol=5e-2), \
        "mismatch vs f32 reference (small batch)"

    # Case 2: replay-buffer-sized batch exercising the batch grid (2 tiles
    # of 512 rows, weights VMEM-resident, batch axis parallel).
    x_big = jax.random.normal(kx_big, (1024, s_size), jnp.float32)
    out_big = jax.block_until_ready(dqn_forward(x_big, params, a_func=False))
    assert out_big.shape == (1024, a_size), out_big.shape
    ref_big = dqn_forward_ref_bf16(x_big, params, a_func=False)
    assert jnp.allclose(out_big, ref_big, atol=1e-4, rtol=1e-4), \
        "mismatch vs bf16 reference (tiled batch)"

    print("KERNEL_OK")
</pallas_src>

<mosaic_0001>
module attributes {stable_mosaic.version = 11 : i64} {
  func.func @_mlp_kernel(%arg0: i32, %arg1: memref<8x128xf32, #tpu.memory_space<vmem>>, %arg2: memref<128x128xbf16, #tpu.memory_space<vmem>>, %arg3: memref<1x128xf32, #tpu.memory_space<vmem>>, %arg4: memref<128x128xbf16, #tpu.memory_space<vmem>>, %arg5: memref<1x128xf32, #tpu.memory_space<vmem>>, %arg6: memref<128x128xbf16, #tpu.memory_space<vmem>>, %arg7: memref<1x128xf32, #tpu.memory_space<vmem>>, %arg8: memref<8x128xf32, #tpu.memory_space<vmem>>) attributes {dimension_semantics = [#tpu.dimension_semantics<parallel>], iteration_bounds = array<i64: 1>, scalar_prefetch = 0 : i64, scratch_operands = 0 : i64, tpu.core_type = #tpu.core_type<tc>, window_params = [{transform_indices = @transform_0, window_bounds = array<i64: 8, 128>}, {pipeline_mode = #tpu.pipeline_mode<synchronous>, transform_indices = @transform_1, window_bounds = array<i64: 128, 128>}, {pipeline_mode = #tpu.pipeline_mode<synchronous>, transform_indices = @transform_2, window_bounds = array<i64: 1, 128>}, {pipeline_mode = #tpu.pipeline_mode<synchronous>, transform_indices = @transform_3, window_bounds = array<i64: 128, 128>}, {pipeline_mode = #tpu.pipeline_mode<synchronous>, transform_indices = @transform_4, window_bounds = array<i64: 1, 128>}, {pipeline_mode = #tpu.pipeline_mode<synchronous>, transform_indices = @transform_5, window_bounds = array<i64: 128, 128>}, {pipeline_mode = #tpu.pipeline_mode<synchronous>, transform_indices = @transform_6, window_bounds = array<i64: 1, 128>}, {transform_indices = @transform_7, window_bounds = array<i64: 8, 128>}]} {
    %c0 = arith.constant 0 : index
    %c0_0 = arith.constant 0 : index
    %0 = vector.load %arg1[%c0, %c0_0] : memref<8x128xf32, #tpu.memory_space<vmem>>, vector<8x128xf32>
    %c0_1 = arith.constant 0 : index
    %c0_2 = arith.constant 0 : index
    %1 = vector.load %arg2[%c0_1, %c0_2] : memref<128x128xbf16, #tpu.memory_space<vmem>>, vector<128x128xbf16>
    %c0_3 = arith.constant 0 : index
    %c0_4 = arith.constant 0 : index
    %2 = vector.load %arg3[%c0_3, %c0_4] : memref<1x128xf32, #tpu.memory_space<vmem>>, vector<1x128xf32>
    %3 = arith.truncf %0 : vector<8x128xf32> to vector<8x128xbf16>
    %cst = arith.constant dense<0.000000e+00> : vector<8x128xf32>
    %4 = tpu.matmul %3, %1, %cst {dimension_numbers = #tpu.dot_dimension_numbers<[1], [0], [0], [1], [0, 0, 1, 1], [], []>} : vector<8x128xbf16>, vector<128x128xbf16>, vector<8x128xf32> -> vector<8x128xf32>
    %5 = vector.broadcast %2 : vector<1x128xf32> to vector<8x128xf32>
    %6 = arith.addf %4, %5 : vector<8x128xf32>
    %7 = arith.negf %6 : vector<8x128xf32>
    %8 = math.exp %7 : vector<8x128xf32>
    %cst_5 = arith.constant 1.000000e+00 : f32
    %9 = vector.broadcast %cst_5 : f32 to vector<8x128xf32>
    %10 = arith.addf %9, %8 : vector<8x128xf32>
    %11 = arith.divf %9, %10 : vector<8x128xf32>
    %c0_6 = arith.constant 0 : index
    %c0_7 = arith.constant 0 : index
    %12 = vector.load %arg4[%c0_6, %c0_7] : memref<128x128xbf16, #tpu.memory_space<vmem>>, vector<128x128xbf16>
    %c0_8 = arith.constant 0 : index
    %c0_9 = arith.constant 0 : index
    %13 = vector.load %arg5[%c0_8, %c0_9] : memref<1x128xf32, #tpu.memory_space<vmem>>, vector<1x128xf32>
    %14 = arith.truncf %11 : vector<8x128xf32> to vector<8x128xbf16>
    %cst_10 = arith.constant dense<0.000000e+00> : vector<8x128xf32>
    %15 = tpu.matmul %14, %12, %cst_10 {dimension_numbers = #tpu.dot_dimension_numbers<[1], [0], [0], [1], [0, 0, 1, 1], [], []>} : vector<8x128xbf16>, vector<128x128xbf16>, vector<8x128xf32> -> vector<8x128xf32>
    %16 = vector.broadcast %13 : vector<1x128xf32> to vector<8x128xf32>
    %17 = arith.addf %15, %16 : vector<8x128xf32>
    %18 = arith.negf %17 : vector<8x128xf32>
    %19 = math.exp %18 : vector<8x128xf32>
    %cst_11 = arith.constant 1.000000e+00 : f32
    %20 = vector.broadcast %cst_11 : f32 to vector<8x128xf32>
    %21 = arith.addf %20, %19 : vector<8x128xf32>
    %22 = arith.divf %20, %21 : vector<8x128xf32>
    %c0_12 = arith.constant 0 : index
    %c0_13 = arith.constant 0 : index
    %23 = vector.load %arg6[%c0_12, %c0_13] : memref<128x128xbf16, #tpu.memory_space<vmem>>, vector<128x128xbf16>
    %c0_14 = arith.constant 0 : index
    %c0_15 = arith.constant 0 : index
    %24 = vector.load %arg7[%c0_14, %c0_15] : memref<1x128xf32, #tpu.memory_space<vmem>>, vector<1x128xf32>
    %25 = arith.truncf %22 : vector<8x128xf32> to vector<8x128xbf16>
    %cst_16 = arith.constant dense<0.000000e+00> : vector<8x128xf32>
    %26 = tpu.matmul %25, %23, %cst_16 {dimension_numbers = #tpu.dot_dimension_numbers<[1], [0], [0], [1], [0, 0, 1, 1], [], []>} : vector<8x128xbf16>, vector<128x128xbf16>, vector<8x128xf32> -> vector<8x128xf32>
    %27 = vector.broadcast %24 : vector<1x128xf32> to vector<8x128xf32>
    %28 = arith.addf %26, %27 : vector<8x128xf32>
    %c0_17 = arith.constant 0 : index
    %c0_18 = arith.constant 0 : index
    %29 = vector.load %arg8[%c0_17, %c0_18] : memref<8x128xf32, #tpu.memory_space<vmem>>, vector<8x128xf32>
    tpu.vector_store %arg8[%c0_17, %c0_18], %28 {strides = array<i32>} : memref<8x128xf32, #tpu.memory_space<vmem>>, vector<8x128xf32>,
    return
  }
  func.func @transform_0(%arg0: i32) -> (i32, i32) {
    %c0_i32 = arith.constant 0 : i32
    %c0_i32_0 = arith.constant 0 : i32
    return %arg0, %c0_i32 : i32, i32
  }
  func.func @transform_1(%arg0: i32) -> (i32, i32) {
    %c0_i32 = arith.constant 0 : i32
    %c0_i32_0 = arith.constant 0 : i32
    %c0_i32_1 = arith.constant 0 : i32
    return %c0_i32, %c0_i32_0 : i32, i32
  }
  func.func @transform_2(%arg0: i32) -> (i32, i32) {
    %c0_i32 = arith.constant 0 : i32
    %c0_i32_0 = arith.constant 0 : i32
    %c0_i32_1 = arith.constant 0 : i32
    return %c0_i32, %c0_i32_0 : i32, i32
  }
  func.func @transform_3(%arg0: i32) -> (i32, i32) {
    %c0_i32 = arith.constant 0 : i32
    %c0_i32_0 = arith.constant 0 : i32
    %c0_i32_1 = arith.constant 0 : i32
    return %c0_i32, %c0_i32_0 : i32, i32
  }
  func.func @transform_4(%arg0: i32) -> (i32, i32) {
    %c0_i32 = arith.constant 0 : i32
    %c0_i32_0 = arith.constant 0 : i32
    %c0_i32_1 = arith.constant 0 : i32
    return %c0_i32, %c0_i32_0 : i32, i32
  }
  func.func @transform_5(%arg0: i32) -> (i32, i32) {
    %c0_i32 = arith.constant 0 : i32
    %c0_i32_0 = arith.constant 0 : i32
    %c0_i32_1 = arith.constant 0 : i32
    return %c0_i32, %c0_i32_0 : i32, i32
  }
  func.func @transform_6(%arg0: i32) -> (i32, i32) {
    %c0_i32 = arith.constant 0 : i32
    %c0_i32_0 = arith.constant 0 : i32
    %c0_i32_1 = arith.constant 0 : i32
    return %c0_i32, %c0_i32_0 : i32, i32
  }
  func.func @transform_7(%arg0: i32) -> (i32, i32) {
    %c0_i32 = arith.constant 0 : i32
    %c0_i32_0 = arith.constant 0 : i32
    return %arg0, %c0_i32 : i32, i32
  }
}

</mosaic_0001>

<llo_original>
// kernel: tpu_custom_call.1
$region0: #{tpu_custom_call.1}
  #allocation0 [shape = 'u32[]', space=smem, size = 0x4, offset = 0x4, fixed_abs, tag = 'smem constant byte address 0x4 - core index']
  #allocation1 [shape = 'u32[144,128]{1,0:T(1,128)}', space=vmem, size = 0x12000, scoped, tag = 'internal scratch']
  %s0 = inlined_call_operand.hbm [shape: f32[8,128], index: 0, kind: input, shape index: {}]
  %s1 = inlined_call_operand.hbm [shape: bf16[128,128], index: 1, kind: input, shape index: {}]
  %s2 = inlined_call_operand.vmem [shape: f32[1,128], index: 2, kind: input, shape index: {}]
  %s3 = inlined_call_operand.hbm [shape: bf16[128,128], index: 3, kind: input, shape index: {}]
  %s4 = inlined_call_operand.vmem [shape: f32[1,128], index: 4, kind: input, shape index: {}]
  %s5 = inlined_call_operand.hbm [shape: bf16[128,128], index: 5, kind: input, shape index: {}]
  %s6 = inlined_call_operand.vmem [shape: f32[1,128], index: 6, kind: input, shape index: {}]
  %s7 = inlined_call_operand.hbm [shape: f32[8,128], index: 7, kind: output, shape index: {}]
  %s8 = sld [smem:[#allocation0]]
  $region54: #{tpu_custom_call.1} parent=0
    _
  %s10 = ssub.s32 1, %s8
  %s11 = scalar_select 0, %s10, %s8
  $region1: #{tpu_custom_call.1} parent=0
    #allocation2 [shape = 'u8[4096]{0}', space=vmem, size = 0x1000, scoped, tag = 'input window, operand 0, single buffered']
    #allocation3 [shape = 's32[1]{0}', space=sflag, size = 0x4, scoped, tag = 'scoped memory for tpu_custom_call.1']
    #allocation4 [shape = 's32[1]{0}', space=sflag, size = 0x4, scoped, tag = 'scoped memory for tpu_custom_call.1']
    #allocation5 [shape = 'u8[32768]{0}', space=vmem, size = 0x8000, scoped, tag = 'input window, operand 1, single buffered']
    #allocation6 [shape = 's32[1]{0}', space=sflag, size = 0x4, scoped, tag = 'scoped memory for tpu_custom_call.1']
    #allocation7 [shape = 'u8[32768]{0}', space=vmem, size = 0x8000, scoped, tag = 'input window, operand 3, single buffered']
    #allocation8 [shape = 'u8[32768]{0}', space=vmem, size = 0x8000, scoped, tag = 'input window, operand 5, single buffered']
    #allocation9 [shape = 's32[1]{0}', space=sflag, size = 0x4, scoped, tag = 'scoped memory for tpu_custom_call.1']
    #allocation10 [shape = 'u8[4096]{0}', space=vmem, size = 0x1000, scoped, tag = 'output window, operand 0, single buffered']
    %12 = vsyncpa [#allocation3], 0
    %13 = vsyncpa [#allocation6], 0
    %14 = vsyncpa [#allocation9], 0
    %15 = vsyncpa [#allocation4], 0
    // Predicated region
    $region2: #{tpu_custom_call.1} parent=1 // pred_check
      _
    $region3: #{tpu_custom_call.1} parent=1 // pred_check_branch
      %17 = sbr.rel (0) target = $region5
    $region4: #{tpu_custom_call.1} parent=1 // pred_region
      %s19 = ssub.s32 128, 128
      %20 = vsyncadd [#allocation3], %s19
      %s22 = sshll.u32 [#allocation2], 4
      %s23 = int_to_ptr.vmem [resolvable:$true] %s22
      %25 = dma.hbm_to_vmem [thread:$0]  %s0, 128, %s23, [#allocation3]
    $region5: #{tpu_custom_call.1} parent=1 // pred_fallthru
      _
    // Predicated region
    $region6: #{tpu_custom_call.1} parent=1 // pred_check
      _
    $region7: #{tpu_custom_call.1} parent=1 // pred_check_branch
      %27 = sbr.rel (0) target = $region9
    $region8: #{tpu_custom_call.1} parent=1 // pred_region
      %s29 = ssub.s32 1024, 1024
      %30 = vsyncadd [#allocation6], %s29
      %s31 = sshll.u32 [#allocation5], 4
      %s32 = int_to_ptr.vmem [resolvable:$true] %s31
      %37 = dma.hbm_to_vmem [thread:$0]  %s1, 1024, %s32, [#allocation6], 64, 64, 4
    $region9: #{tpu_custom_call.1} parent=1 // pred_fallthru
      _
    // Predicated region
    $region10: #{tpu_custom_call.1} parent=1 // pred_check
      _
    $region11: #{tpu_custom_call.1} parent=1 // pred_check_branch
      %39 = sbr.rel (0) target = $region13
    $region12: #{tpu_custom_call.1} parent=1 // pred_region
      _
    $region13: #{tpu_custom_call.1} parent=1 // pred_fallthru
      _
    // Predicated region
    $region14: #{tpu_custom_call.1} parent=1 // pred_check
      _
    $region15: #{tpu_custom_call.1} parent=1 // pred_check_branch
      %41 = sbr.rel (0) target = $region17
    $region16: #{tpu_custom_call.1} parent=1 // pred_region
      %s43 = ssub.s32 1024, 1024
      %44 = vsyncadd [#allocation6], %s43
      %s45 = sshll.u32 [#allocation7], 4
      %s46 = int_to_ptr.vmem [resolvable:$true] %s45
      %51 = dma.hbm_to_vmem [thread:$0]  %s3, 1024, %s46, [#allocation6], 64, 64, 4
    $region17: #{tpu_custom_call.1} parent=1 // pred_fallthru
      _
    // Predicated region
    $region18: #{tpu_custom_call.1} parent=1 // pred_check
      _
    $region19: #{tpu_custom_call.1} parent=1 // pred_check_branch
      %53 = sbr.rel (0) target = $region21
    $region20: #{tpu_custom_call.1} parent=1 // pred_region
      _
    $region21: #{tpu_custom_call.1} parent=1 // pred_fallthru
      _
    // Predicated region
    $region22: #{tpu_custom_call.1} parent=1 // pred_check
      _
    $region23: #{tpu_custom_call.1} parent=1 // pred_check_branch
      %55 = sbr.rel (0) target = $region25
    $region24: #{tpu_custom_call.1} parent=1 // pred_region
      %s57 = ssub.s32 1024, 1024
      %58 = vsyncadd [#allocation9], %s57
      %s59 = sshll.u32 [#allocation8], 4
      %s60 = int_to_ptr.vmem [resolvable:$true] %s59
      %65 = dma.hbm_to_vmem [thread:$0]  %s5, 1024, %s60, [#allocation9], 64, 64, 4
    $region25: #{tpu_custom_call.1} parent=1 // pred_fallthru
      _
    // Predicated region
    $region26: #{tpu_custom_call.1} parent=1 // pred_check
      _
    $region27: #{tpu_custom_call.1} parent=1 // pred_check_branch
      %67 = sbr.rel (0) target = $region29
    $region28: #{tpu_custom_call.1} parent=1 // pred_region
      _
    $region29: #{tpu_custom_call.1} parent=1 // pred_fallthru
      _
    // Predicated region
    $region30: #{tpu_custom_call.1} parent=1 // pred_check
      _
    $region31: #{tpu_custom_call.1} parent=1 // pred_check_branch
      %69 = sbr.rel (0) target = $region33
    $region32: #{tpu_custom_call.1} parent=1 // pred_region
      %70 = dma.done [#allocation3], 128
    $region33: #{tpu_custom_call.1} parent=1 // pred_fallthru
      _
    // Predicated region
    $region34: #{tpu_custom_call.1} parent=1 // pred_check
      _
    $region35: #{tpu_custom_call.1} parent=1 // pred_check_branch
      %72 = sbr.rel (0) target = $region37
    $region36: #{tpu_custom_call.1} parent=1 // pred_region
      %73 = dma.done [#allocation6], 1024
    $region37: #{tpu_custom_call.1} parent=1 // pred_fallthru
      _
    // Predicated region
    $region38: #{tpu_custom_call.1} parent=1 // pred_check
      _
    $region39: #{tpu_custom_call.1} parent=1 // pred_check_branch
      %75 = sbr.rel (0) target = $region41
    $region40: #{tpu_custom_call.1} parent=1 // pred_region
      %76 = dma.done [#allocation6], 1024
    $region41: #{tpu_custom_call.1} parent=1 // pred_fallthru
      _
    // Predicated region
    $region42: #{tpu_custom_call.1} parent=1 // pred_check
      _
    $region43: #{tpu_custom_call.1} parent=1 // pred_check_branch
      %78 = sbr.rel (0) target = $region45
    $region44: #{tpu_custom_call.1} parent=1 // pred_region
      %79 = dma.done [#allocation9], 1024
    $region45: #{tpu_custom_call.1} parent=1 // pred_fallthru
      _
    %v81 = vld [vmem:[#allocation2] sm:$0xff]
    %v82 = vld [vmem:[#allocation5] sm:$0xf]
    %v83 = vld [vmem:[#allocation5 + $0x4] sm:$0xf]
    %v84 = vld [vmem:[#allocation5 + $0x8] sm:$0xf]
    %v85 = vld [vmem:[#allocation5 + $0xc] sm:$0xf]
    %v86 = vld [vmem:[#allocation5 + $0x10] sm:$0xf]
    %v87 = vld [vmem:[#allocation5 + $0x14] sm:$0xf]
    %v88 = vld [vmem:[#allocation5 + $0x18] sm:$0xf]
    %v89 = vld [vmem:[#allocation5 + $0x1c] sm:$0xf]
    %v90 = vld [vmem:[#allocation5 + $0x20] sm:$0xf]
    %v91 = vld [vmem:[#allocation5 + $0x24] sm:$0xf]
    %v92 = vld [vmem:[#allocation5 + $0x28] sm:$0xf]
    %v93 = vld [vmem:[#allocation5 + $0x2c] sm:$0xf]
    %v94 = vld [vmem:[#allocation5 + $0x30] sm:$0xf]
    %v95 = vld [vmem:[#allocation5 + $0x34] sm:$0xf]
    %v96 = vld [vmem:[#allocation5 + $0x38] sm:$0xf]
    %v97 = vld [vmem:[#allocation5 + $0x3c] sm:$0xf]
    %v98 = vld [vmem:[%s2] sm:$0x1]
    %v99 = vpack.c.bf16 %v81, %v81
    %v101 = vlaneseq
    %v102 = vshrl.u32 %v101, 7
    %v103 = vsub.s32 0, %v102
    %v104 = vrot.slane %v98, %v103
    %v122 = vunpack.c.l.b16 %v82
    %v123 = vunpack.c.l.b16 %v83
    %v124 = vunpack.c.l.b16 %v84
    %v125 = vunpack.c.l.b16 %v85
    %v126 = vunpack.c.l.b16 %v86
    %v127 = vunpack.c.l.b16 %v87
    %v128 = vunpack.c.l.b16 %v88
    %v129 = vunpack.c.l.b16 %v89
    %v130 = vunpack.c.l.b16 %v90
    %v131 = vunpack.c.l.b16 %v91
    %v132 = vunpack.c.l.b16 %v92
    %v133 = vunpack.c.l.b16 %v93
    %v134 = vunpack.c.l.b16 %v94
    %v135 = vunpack.c.l.b16 %v95
    %v136 = vunpack.c.l.b16 %v96
    %v137 = vunpack.c.l.b16 %v97
    %v138 = vpack.c.b16 %v123, %v122
    %v139 = vpack.c.b16 %v125, %v124
    %v140 = vpack.c.b16 %v127, %v126
    %v141 = vpack.c.b16 %v129, %v128
    %v142 = vpack.c.b16 %v131, %v130
    %v143 = vpack.c.b16 %v133, %v132
    %v144 = vpack.c.b16 %v135, %v134
    %v145 = vpack.c.b16 %v137, %v136
    %154 = vmatprep.subr.bf16.mxu0 0
    %155 = vmatpush1.bf16.msra.mxu0 %v138
    %156 = vmatprep.subr.bf16.mxu0 0
    %157 = vmatpush1.bf16.msra.mxu0 %v139
    %158 = vmatprep.subr.bf16.mxu0 0
    %159 = vmatpush1.bf16.msra.mxu0 %v140
    %160 = vmatprep.subr.bf16.mxu0 0
    %161 = vmatpush1.bf16.msra.mxu0 %v141
    %162 = vmatprep.subr.bf16.mxu0 0
    %163 = vmatpush1.bf16.msra.mxu0 %v142
    %164 = vmatprep.subr.bf16.mxu0 0
    %165 = vmatpush1.bf16.msra.mxu0 %v143
    %166 = vmatprep.subr.bf16.mxu0 0
    %167 = vmatpush1.bf16.msra.mxu0 %v144
    %168 = vmatprep.subr.bf16.mxu0 0
    %169 = vmatpush1.bf16.msra.mxu0 %v145
    %170 = vmatprep.subr.bf16.mxu0 0
    %171 = vmatpush1.bf16.msra.mxu0 0
    %172 = vmatprep.subr.bf16.mxu0 0
    %173 = vmatpush1.bf16.msra.mxu0 0
    %174 = vmatprep.subr.bf16.mxu0 0
    %175 = vmatpush1.bf16.msra.mxu0 0
    %176 = vmatprep.subr.bf16.mxu0 0
    %177 = vmatpush1.bf16.msra.mxu0 0
    %178 = vmatprep.subr.bf16.mxu0 0
    %179 = vmatpush1.bf16.msra.mxu0 0
    %180 = vmatprep.subr.bf16.mxu0 0
    %181 = vmatpush1.bf16.msra.mxu0 0
    %182 = vmatprep.subr.bf16.mxu0 0
    %183 = vmatpush1.bf16.msra.mxu0 0
    %184 = vmatprep.subr.bf16.mxu0 0
    %185 = vmatpush1.bf16.msra.mxu0 0
    %186 = vmatprep.mubr.bf16.mxu0 0
    %187 = vmatmul.mubr.bf16.gmra.mrb[0].mxu0 %v99
    %v188 = vpop.f32.mrb[0].mxu0
    %v189 = vadd.f32 %v104, %v188
    %v190 = vpop.f32.mrb[0].mxu0
    %v191 = vpop.f32.mrb[0].mxu0
    %v192 = vpop.f32.mrb[0].mxu0
    %193 = vdwg.mxu0
    %v194 = vxor.u32 %v189, 2147483648
    %v195 = vmul.f32 %v194, 1.442695
    %v196 = vpow.pop %v195
    %v197 = vadd.f32 %v196, 1.0
    %v198 = vrcp.pop %v197
    %v199 = vmul.f32 1.0, %v198
    %v200 = vld [vmem:[#allocation7] sm:$0xf]
    %v201 = vld [vmem:[#allocation7 + $0x4] sm:$0xf]
    %v202 = vld [vmem:[#allocation7 + $0x8] sm:$0xf]
    %v203 = vld [vmem:[#allocation7 + $0xc] sm:$0xf]
    %v204 = vld [vmem:[#allocation7 + $0x10] sm:$0xf]
    %v205 = vld [vmem:[#allocation7 + $0x14] sm:$0xf]
    %v206 = vld [vmem:[#allocation7 + $0x18] sm:$0xf]
    %v207 = vld [vmem:[#allocation7 + $0x1c] sm:$0xf]
    %v208 = vld [vmem:[#allocation7 + $0x20] sm:$0xf]
    %v209 = vld [vmem:[#allocation7 + $0x24] sm:$0xf]
    %v210 = vld [vmem:[#allocation7 + $0x28] sm:$0xf]
    %v211 = vld [vmem:[#allocation7 + $0x2c] sm:$0xf]
    %v212 = vld [vmem:[#allocation7 + $0x30] sm:$0xf]
    %v213 = vld [vmem:[#allocation7 + $0x34] sm:$0xf]
    %v214 = vld [vmem:[#allocation7 + $0x38] sm:$0xf]
    %v215 = vld [vmem:[#allocation7 + $0x3c] sm:$0xf]
    %v216 = vld [vmem:[%s4] sm:$0x1]
    %v217 = vpack.c.bf16 %v199, %v199
    %v219 = vlaneseq
    %v220 = vshrl.u32 %v219, 7
    %v221 = vsub.s32 0, %v220
    %v222 = vrot.slane %v216, %v221
    %v240 = vunpack.c.l.b16 %v200
    %v241 = vunpack.c.l.b16 %v201
    %v242 = vunpack.c.l.b16 %v202
    %v243 = vunpack.c.l.b16 %v203
    %v244 = vunpack.c.l.b16 %v204
    %v245 = vunpack.c.l.b16 %v205
    %v246 = vunpack.c.l.b16 %v206
    %v247 = vunpack.c.l.b16 %v207
    %v248 = vunpack.c.l.b16 %v208
    %v249 = vunpack.c.l.b16 %v209
    %v250 = vunpack.c.l.b16 %v210
    %v251 = vunpack.c.l.b16 %v211
    %v252 = vunpack.c.l.b16 %v212
    %v253 = vunpack.c.l.b16 %v213
    %v254 = vunpack.c.l.b16 %v214
    %v255 = vunpack.c.l.b16 %v215
    %v256 = vpack.c.b16 %v241, %v240
    %v257 = vpack.c.b16 %v243, %v242
    %v258 = vpack.c.b16 %v245, %v244
    %v259 = vpack.c.b16 %v247, %v246
    %v260 = vpack.c.b16 %v249, %v248
    %v261 = vpack.c.b16 %v251, %v250
    %v262 = vpack.c.b16 %v253, %v252
    %v263 = vpack.c.b16 %v255, %v254
    %272 = vmatprep.subr.bf16.mxu0 0
    %273 = vmatpush1.bf16.msra.mxu0 %v256
    %274 = vmatprep.subr.bf16.mxu0 0
    %275 = vmatpush1.bf16.msra.mxu0 %v257
    %276 = vmatprep.subr.bf16.mxu0 0
    %277 = vmatpush1.bf16.msra.mxu0 %v258
    %278 = vmatprep.subr.bf16.mxu0 0
    %279 = vmatpush1.bf16.msra.mxu0 %v259
    %280 = vmatprep.subr.bf16.mxu0 0
    %281 = vmatpush1.bf16.msra.mxu0 %v260
    %282 = vmatprep.subr.bf16.mxu0 0
    %283 = vmatpush1.bf16.msra.mxu0 %v261
    %284 = vmatprep.subr.bf16.mxu0 0
    %285 = vmatpush1.bf16.msra.mxu0 %v262
    %286 = vmatprep.subr.bf16.mxu0 0
    %287 = vmatpush1.bf16.msra.mxu0 %v263
    %288 = vmatprep.subr.bf16.mxu0 0
    %289 = vmatpush1.bf16.msra.mxu0 0
    %290 = vmatprep.subr.bf16.mxu0 0
    %291 = vmatpush1.bf16.msra.mxu0 0
    %292 = vmatprep.subr.bf16.mxu0 0
    %293 = vmatpush1.bf16.msra.mxu0 0
    %294 = vmatprep.subr.bf16.mxu0 0
    %295 = vmatpush1.bf16.msra.mxu0 0
    %296 = vmatprep.subr.bf16.mxu0 0
    %297 = vmatpush1.bf16.msra.mxu0 0
    %298 = vmatprep.subr.bf16.mxu0 0
    %299 = vmatpush1.bf16.msra.mxu0 0
    %300 = vmatprep.subr.bf16.mxu0 0
    %301 = vmatpush1.bf16.msra.mxu0 0
    %302 = vmatprep.subr.bf16.mxu0 0
    %303 = vmatpush1.bf16.msra.mxu0 0
    %304 = vmatprep.mubr.bf16.mxu0 0
    %305 = vmatmul.mubr.bf16.gmra.mrb[0].mxu0 %v217
    %v306 = vpop.f32.mrb[0].mxu0
    %v307 = vadd.f32 %v222, %v306
    %v308 = vpop.f32.mrb[0].mxu0
    %v309 = vpop.f32.mrb[0].mxu0
    %v310 = vpop.f32.mrb[0].mxu0
    %311 = vdwg.mxu0
    %v312 = vxor.u32 %v307, 2147483648
    %v313 = vmul.f32 %v312, 1.442695
    %v314 = vpow.pop %v313
    %v315 = vadd.f32 %v314, 1.0
    %v316 = vrcp.pop %v315
    %v317 = vmul.f32 1.0, %v316
    %v318 = vld [vmem:[#allocation8] sm:$0xf]
    %v319 = vld [vmem:[#allocation8 + $0x4] sm:$0xf]
    %v320 = vld [vmem:[#allocation8 + $0x8] sm:$0xf]
    %v321 = vld [vmem:[#allocation8 + $0xc] sm:$0xf]
    %v322 = vld [vmem:[#allocation8 + $0x10] sm:$0xf]
    %v323 = vld [vmem:[#allocation8 + $0x14] sm:$0xf]
    %v324 = vld [vmem:[#allocation8 + $0x18] sm:$0xf]
    %v325 = vld [vmem:[#allocation8 + $0x1c] sm:$0xf]
    %v326 = vld [vmem:[#allocation8 + $0x20] sm:$0xf]
    %v327 = vld [vmem:[#allocation8 + $0x24] sm:$0xf]
    %v328 = vld [vmem:[#allocation8 + $0x28] sm:$0xf]
    %v329 = vld [vmem:[#allocation8 + $0x2c] sm:$0xf]
    %v330 = vld [vmem:[#allocation8 + $0x30] sm:$0xf]
    %v331 = vld [vmem:[#allocation8 + $0x34] sm:$0xf]
    %v332 = vld [vmem:[#allocation8 + $0x38] sm:$0xf]
    %v333 = vld [vmem:[#allocation8 + $0x3c] sm:$0xf]
    %v334 = vld [vmem:[%s6] sm:$0x1]
    %v335 = vpack.c.bf16 %v317, %v317
    %v337 = vlaneseq
    %v338 = vshrl.u32 %v337, 7
    %v339 = vsub.s32 0, %v338
    %v340 = vrot.slane %v334, %v339
    %v358 = vunpack.c.l.b16 %v318
    %v359 = vunpack.c.l.b16 %v319
    %v360 = vunpack.c.l.b16 %v320
    %v361 = vunpack.c.l.b16 %v321
    %v362 = vunpack.c.l.b16 %v322
    %v363 = vunpack.c.l.b16 %v323
    %v364 = vunpack.c.l.b16 %v324
    %v365 = vunpack.c.l.b16 %v325
    %v366 = vunpack.c.l.b16 %v326
    %v367 = vunpack.c.l.b16 %v327
    %v368 = vunpack.c.l.b16 %v328
    %v369 = vunpack.c.l.b16 %v329
    %v370 = vunpack.c.l.b16 %v330
    %v371 = vunpack.c.l.b16 %v331
    %v372 = vunpack.c.l.b16 %v332
    %v373 = vunpack.c.l.b16 %v333
    %v374 = vpack.c.b16 %v359, %v358
    %v375 = vpack.c.b16 %v361, %v360
    %v376 = vpack.c.b16 %v363, %v362
    %v377 = vpack.c.b16 %v365, %v364
    %v378 = vpack.c.b16 %v367, %v366
    %v379 = vpack.c.b16 %v369, %v368
    %v380 = vpack.c.b16 %v371, %v370
    %v381 = vpack.c.b16 %v373, %v372
    %390 = vmatprep.subr.bf16.mxu0 0
    %391 = vmatpush1.bf16.msra.mxu0 %v374
    %392 = vmatprep.subr.bf16.mxu0 0
    %393 = vmatpush1.bf16.msra.mxu0 %v375
    %394 = vmatprep.subr.bf16.mxu0 0
    %395 = vmatpush1.bf16.msra.mxu0 %v376
    %396 = vmatprep.subr.bf16.mxu0 0
    %397 = vmatpush1.bf16.msra.mxu0 %v377
    %398 = vmatprep.subr.bf16.mxu0 0
    %399 = vmatpush1.bf16.msra.mxu0 %v378
    %400 = vmatprep.subr.bf16.mxu0 0
    %401 = vmatpush1.bf16.msra.mxu0 %v379
    %402 = vmatprep.subr.bf16.mxu0 0
    %403 = vmatpush1.bf16.msra.mxu0 %v380
    %404 = vmatprep.subr.bf16.mxu0 0
    %405 = vmatpush1.bf16.msra.mxu0 %v381
    %406 = vmatprep.subr.bf16.mxu0 0
    %407 = vmatpush1.bf16.msra.mxu0 0
    %408 = vmatprep.subr.bf16.mxu0 0
    %409 = vmatpush1.bf16.msra.mxu0 0
    %410 = vmatprep.subr.bf16.mxu0 0
    %411 = vmatpush1.bf16.msra.mxu0 0
    %412 = vmatprep.subr.bf16.mxu0 0
    %413 = vmatpush1.bf16.msra.mxu0 0
    %414 = vmatprep.subr.bf16.mxu0 0
    %415 = vmatpush1.bf16.msra.mxu0 0
    %416 = vmatprep.subr.bf16.mxu0 0
    %417 = vmatpush1.bf16.msra.mxu0 0
    %418 = vmatprep.subr.bf16.mxu0 0
    %419 = vmatpush1.bf16.msra.mxu0 0
    %420 = vmatprep.subr.bf16.mxu0 0
    %421 = vmatpush1.bf16.msra.mxu0 0
    %422 = vmatprep.mubr.bf16.mxu0 0
    %423 = vmatmul.mubr.bf16.gmra.mrb[0].mxu0 %v335
    %v424 = vpop.f32.mrb[0].mxu0
    %v425 = vadd.f32 %v340, %v424
    %v426 = vpop.f32.mrb[0].mxu0
    %v427 = vpop.f32.mrb[0].mxu0
    %v428 = vpop.f32.mrb[0].mxu0
    %429 = vdwg.mxu0
    %430 = vst [vmem:[#allocation10] sm:$0xff] %v425
    // Predicated region
    $region46: #{tpu_custom_call.1} parent=1 // pred_check
      _
    $region47: #{tpu_custom_call.1} parent=1 // pred_check_branch
      %432 = sbr.rel (0) target = $region49
    $region48: #{tpu_custom_call.1} parent=1 // pred_region
      %s434 = ssub.s32 128, 128
      %435 = vsyncadd [#allocation4], %s434
      %s437 = sshll.u32 [#allocation10], 4
      %s438 = int_to_ptr.vmem [resolvable:$true] %s437
      %440 = dma.vmem_to_hbm [thread:$0]  %s438, 128, %s7, [#allocation4]
    $region49: #{tpu_custom_call.1} parent=1 // pred_fallthru
      _
    // Predicated region
    $region50: #{tpu_custom_call.1} parent=1 // pred_check
      _
    $region51: #{tpu_custom_call.1} parent=1 // pred_check_branch
      %442 = sbr.rel (0) target = $region53
    $region52: #{tpu_custom_call.1} parent=1 // pred_region
      %443 = dma.done [#allocation4], 128
    $region53: #{tpu_custom_call.1} parent=1 // pred_fallthru
      _
    %444 = vsyncpa [#allocation3], 1
    %445 = vsyncpa [#allocation6], 1
    %446 = vsyncpa [#allocation9], 1
    %447 = vsyncpa [#allocation4], 1

</llo_original>
